<compile_context>
chip_gen: v6e
topology: v6e:2x2x1
jax: 0.10.0
libtpu: 0.0.40
codegen_flags: <defaults>
</compile_context>

<pallas_src>
import jax
import jax.numpy as jnp
from jax import lax
from jax.experimental import pallas as pl
from jax.experimental.pallas import tpu as pltpu


def _mlp_kernel(x_ref, w1_ref, b1_ref, w2_ref, b2_ref, w3t_ref, b3_ref, o_ref):
    # Explicit bf16 cast point for the MXU (x may arrive f32 or bf16).
    x = x_ref[...].astype(jnp.bfloat16)

    # fc1 + ReLU   (bf16 x bf16 -> f32 accumulate)
    h1 = jnp.dot(x, w1_ref[...], preferred_element_type=jnp.float32) + b1_ref[...]
    h1 = jnp.maximum(h1, 0.0)

    # fc2 + ReLU
    h2 = jnp.dot(h1.astype(jnp.bfloat16), w2_ref[...],
                 preferred_element_type=jnp.float32) + b2_ref[...]
    h2 = jnp.maximum(h2, 0.0)

    # fc3: contract L2 of w3^T (1, L2) against L2 of h2 (tile_b, L2) -> (1, tile_b).
    # Batch lands on lanes => lane-dense, single-column-equivalent output.
    z = lax.dot_general(w3t_ref[...], h2.astype(jnp.bfloat16),
                        dimension_numbers=(((1,), (1,)), ((), ())),
                        preferred_element_type=jnp.float32)
    z = z + b3_ref[0, 0]                      # scalar bias from SMEM
    o_ref[...] = jax.nn.sigmoid(z).astype(o_ref.dtype)   # sigmoid on real outputs only


def _round_up(a, m):
    return -(-a // m) * m


def _select_tile_b(batch, cap):
    """Batch tile: small batches -> one step (mult of 8); otherwise multiples of 128,
    sized so the grid has >= 2 steps (v7x has 2 TensorCores)."""
    if batch <= 128:
        return _round_up(batch, 8)
    half = _round_up(pl.cdiv(batch, 2), 128)
    return max(128, min(_round_up(cap, 128), half))


def mlp_forward(x, kparams, tile_b=1024):
    """x: (B, F) float32 (or bfloat16). kparams from pack_params(). Returns (B, 1) f32."""
    w1, b1 = kparams["w1"], kparams["b1"]
    w2, b2 = kparams["w2"], kparams["b2"]
    w3t, b3 = kparams["w3_t"], kparams["b3"]

    B, F = x.shape
    L1 = w1.shape[1]
    L2 = w2.shape[1]

    tb = _select_tile_b(B, tile_b)
    nt = pl.cdiv(B, tb)
    bp = nt * tb

    cost = pl.CostEstimate(
        flops=int(2 * bp * (F * L1 + L1 * L2 + L2)),
        transcendentals=int(bp),
        bytes_accessed=int(x.size * x.dtype.itemsize
                           + w1.size * 2 + w2.size * 2 + w3t.size * 2
                           + b1.size * 4 + b2.size * 4 + 4
                           + bp * 4),
    )

    out = pl.pallas_call(
        _mlp_kernel,
        out_shape=jax.ShapeDtypeStruct((1, bp), jnp.float32),
        grid=(nt,),
        in_specs=[
            pl.BlockSpec((tb, F), lambda i: (i, 0)),            # x: batch-tiled stream
            pl.BlockSpec((F, L1), lambda i: (0, 0)),            # w1: VMEM-resident
            pl.BlockSpec((1, L1), lambda i: (0, 0)),            # b1: resident
            pl.BlockSpec((L1, L2), lambda i: (0, 0)),           # w2: resident
            pl.BlockSpec((1, L2), lambda i: (0, 0)),            # b2: resident
            pl.BlockSpec((1, L2), lambda i: (0, 0)),            # w3^T: resident
            pl.BlockSpec(memory_space=pltpu.MemorySpace.SMEM),  # b3 scalar in SMEM
        ],
        out_specs=pl.BlockSpec((1, tb), lambda i: (0, i)),      # lane-dense output row
        compiler_params=pltpu.CompilerParams(
            dimension_semantics=("parallel",)),
        cost_estimate=cost,
    )(x, w1, b1, w2, b2, w3t, b3)

    # Epilogue is a tiny slice/reshape of B*4 bytes (no full-array pass).
    return out[0, :B].reshape(B, 1)


def init_params(key, features_in, l1=128, l2=64):
    """Deterministic init mimicking PyTorch nn.Linear (uniform +-1/sqrt(fan_in)).
    Weights stored transposed vs PyTorch: (in_features, out_features)."""
    ks = jax.random.split(key, 6)

    def lin(kw, kb, fan_in, fan_out):
        bound = 1.0 / jnp.sqrt(fan_in)
        w = jax.random.uniform(kw, (fan_in, fan_out), jnp.float32, -bound, bound)
        b = jax.random.uniform(kb, (1, fan_out), jnp.float32, -bound, bound)
        return w, b

    w1, b1 = lin(ks[0], ks[1], features_in, l1)
    w2, b2 = lin(ks[2], ks[3], l1, l2)
    w3, b3 = lin(ks[4], ks[5], l2, 1)
    return dict(w1=w1, b1=b1, w2=w2, b2=b2, w3=w3, b3=b3)


def pack_params(p):
    """Kernel storage layout: bf16 matmul weights, fc3 weight transposed to (1, L2)
    so the last matmul puts batch on lanes, fc3 bias as a (1,1) f32 scalar for SMEM."""
    return dict(
        w1=p["w1"].astype(jnp.bfloat16),
        b1=p["b1"],
        w2=p["w2"].astype(jnp.bfloat16),
        b2=p["b2"],
        w3_t=p["w3"].T.astype(jnp.bfloat16),          # (1, L2)
        b3=p["b3"].reshape(1, 1).astype(jnp.float32),
    )


def mlp_reference(x, p):
    h = jnp.maximum(x @ p["w1"] + p["b1"], 0.0)
    h = jnp.maximum(h @ p["w2"] + p["b2"], 0.0)
    return jax.nn.sigmoid(h @ p["w3"] + p["b3"])


if __name__ == "__main__":
    key = jax.random.PRNGKey(0)
    k_x, k_p = jax.random.split(key)

    B, F = 8, 32  # small shapes: batch=8, features_in=32
    x = jax.random.normal(k_x, (B, F), jnp.float32)
    params = init_params(k_p, F, l1=128, l2=64)
    kparams = pack_params(params)

    out = jax.block_until_ready(mlp_forward(x, kparams))
    ref = mlp_reference(x, params)
    assert out.shape == (B, 1)
    # bf16 matmul operands vs f32 reference -> loosened tolerance.
    assert jnp.allclose(out, ref, atol=5e-2, rtol=0.0), \
        float(jnp.max(jnp.abs(out - ref)))

    # Also exercise a multi-tile batch grid with a non-divisible batch.
    B2 = 300
    x2 = jax.random.normal(k_x, (B2, F), jnp.float32)
    out2 = jax.block_until_ready(mlp_forward(x2, kparams, tile_b=128))
    ref2 = mlp_reference(x2, params)
    assert out2.shape == (B2, 1)
    assert jnp.allclose(out2, ref2, atol=5e-2, rtol=0.0)

    print("KERNEL_OK")
</pallas_src>

<mosaic_0001>
module attributes {stable_mosaic.version = 11 : i64} {
  func.func @_mlp_kernel(%arg0: i32, %arg1: memref<8x32xf32, #tpu.memory_space<vmem>>, %arg2: memref<32x128xbf16, #tpu.memory_space<vmem>>, %arg3: memref<1x128xf32, #tpu.memory_space<vmem>>, %arg4: memref<128x64xbf16, #tpu.memory_space<vmem>>, %arg5: memref<1x64xf32, #tpu.memory_space<vmem>>, %arg6: memref<1x64xbf16, #tpu.memory_space<vmem>>, %arg7: memref<1x1xf32, #tpu.memory_space<smem>>, %arg8: memref<1x8xf32, #tpu.memory_space<vmem>>) attributes {dimension_semantics = [#tpu.dimension_semantics<parallel>], iteration_bounds = array<i64: 1>, scalar_prefetch = 0 : i64, scratch_operands = 0 : i64, tpu.core_type = #tpu.core_type<tc>, window_params = [{transform_indices = @transform_0, window_bounds = array<i64: 8, 32>}, {pipeline_mode = #tpu.pipeline_mode<synchronous>, transform_indices = @transform_1, window_bounds = array<i64: 32, 128>}, {pipeline_mode = #tpu.pipeline_mode<synchronous>, transform_indices = @transform_2, window_bounds = array<i64: 1, 128>}, {pipeline_mode = #tpu.pipeline_mode<synchronous>, transform_indices = @transform_3, window_bounds = array<i64: 128, 64>}, {pipeline_mode = #tpu.pipeline_mode<synchronous>, transform_indices = @transform_4, window_bounds = array<i64: 1, 64>}, {pipeline_mode = #tpu.pipeline_mode<synchronous>, transform_indices = @transform_5, window_bounds = array<i64: 1, 64>}, {transform_indices = @transform_6, window_bounds = array<i64: 1, 1>}, {transform_indices = @transform_7, window_bounds = array<i64: 1, 8>}]} {
    %c0 = arith.constant 0 : index
    %c0_0 = arith.constant 0 : index
    %0 = vector.load %arg1[%c0, %c0_0] : memref<8x32xf32, #tpu.memory_space<vmem>>, vector<8x32xf32>
    %1 = arith.truncf %0 : vector<8x32xf32> to vector<8x32xbf16>
    %c0_1 = arith.constant 0 : index
    %c0_2 = arith.constant 0 : index
    %2 = vector.load %arg2[%c0_1, %c0_2] : memref<32x128xbf16, #tpu.memory_space<vmem>>, vector<32x128xbf16>
    %cst = arith.constant dense<0.000000e+00> : vector<8x128xf32>
    %3 = tpu.matmul %1, %2, %cst {dimension_numbers = #tpu.dot_dimension_numbers<[1], [0], [0], [1], [0, 0, 1, 1], [], []>} : vector<8x32xbf16>, vector<32x128xbf16>, vector<8x128xf32> -> vector<8x128xf32>
    %c0_3 = arith.constant 0 : index
    %c0_4 = arith.constant 0 : index
    %4 = vector.load %arg3[%c0_3, %c0_4] : memref<1x128xf32, #tpu.memory_space<vmem>>, vector<1x128xf32>
    %5 = vector.broadcast %4 : vector<1x128xf32> to vector<8x128xf32>
    %6 = arith.addf %3, %5 : vector<8x128xf32>
    %cst_5 = arith.constant 0.000000e+00 : f32
    %7 = vector.broadcast %cst_5 : f32 to vector<8x128xf32>
    %8 = arith.maximumf %6, %7 : vector<8x128xf32>
    %9 = arith.truncf %8 : vector<8x128xf32> to vector<8x128xbf16>
    %c0_6 = arith.constant 0 : index
    %c0_7 = arith.constant 0 : index
    %10 = vector.load %arg4[%c0_6, %c0_7] : memref<128x64xbf16, #tpu.memory_space<vmem>>, vector<128x64xbf16>
    %cst_8 = arith.constant dense<0.000000e+00> : vector<8x64xf32>
    %11 = tpu.matmul %9, %10, %cst_8 {dimension_numbers = #tpu.dot_dimension_numbers<[1], [0], [0], [1], [0, 0, 1, 1], [], []>} : vector<8x128xbf16>, vector<128x64xbf16>, vector<8x64xf32> -> vector<8x64xf32>
    %c0_9 = arith.constant 0 : index
    %c0_10 = arith.constant 0 : index
    %12 = vector.load %arg5[%c0_9, %c0_10] : memref<1x64xf32, #tpu.memory_space<vmem>>, vector<1x64xf32>
    %13 = vector.broadcast %12 : vector<1x64xf32> to vector<8x64xf32>
    %14 = arith.addf %11, %13 : vector<8x64xf32>
    %cst_11 = arith.constant 0.000000e+00 : f32
    %15 = vector.broadcast %cst_11 : f32 to vector<8x64xf32>
    %16 = arith.maximumf %14, %15 : vector<8x64xf32>
    %c0_12 = arith.constant 0 : index
    %c0_13 = arith.constant 0 : index
    %17 = vector.load %arg6[%c0_12, %c0_13] : memref<1x64xbf16, #tpu.memory_space<vmem>>, vector<1x64xbf16>
    %18 = arith.truncf %16 : vector<8x64xf32> to vector<8x64xbf16>
    %cst_14 = arith.constant dense<0.000000e+00> : vector<1x8xf32>
    %19 = tpu.matmul %17, %18, %cst_14 {dimension_numbers = #tpu.dot_dimension_numbers<[1], [1], [0], [0], [0, 0, 1, 0], [], []>} : vector<1x64xbf16>, vector<8x64xbf16>, vector<1x8xf32> -> vector<1x8xf32>
    %c0_15 = arith.constant 0 : index
    %c0_16 = arith.constant 0 : index
    %20 = memref.load %arg7[%c0_15, %c0_16] : memref<1x1xf32, #tpu.memory_space<smem>>
    %21 = vector.broadcast %20 : f32 to vector<1x8xf32>
    %22 = arith.addf %19, %21 : vector<1x8xf32>
    %23 = arith.negf %22 : vector<1x8xf32>
    %24 = math.exp %23 : vector<1x8xf32>
    %cst_17 = arith.constant 1.000000e+00 : f32
    %25 = vector.broadcast %cst_17 : f32 to vector<1x8xf32>
    %26 = arith.addf %25, %24 : vector<1x8xf32>
    %27 = arith.divf %25, %26 : vector<1x8xf32>
    %c0_18 = arith.constant 0 : index
    %c0_19 = arith.constant 0 : index
    %28 = vector.load %arg8[%c0_18, %c0_19] : memref<1x8xf32, #tpu.memory_space<vmem>>, vector<1x8xf32>
    tpu.vector_store %arg8[%c0_18, %c0_19], %27 {strides = array<i32>} : memref<1x8xf32, #tpu.memory_space<vmem>>, vector<1x8xf32>,
    return
  }
  func.func @transform_0(%arg0: i32) -> (i32, i32) {
    %c0_i32 = arith.constant 0 : i32
    %c0_i32_0 = arith.constant 0 : i32
    return %arg0, %c0_i32 : i32, i32
  }
  func.func @transform_1(%arg0: i32) -> (i32, i32) {
    %c0_i32 = arith.constant 0 : i32
    %c0_i32_0 = arith.constant 0 : i32
    %c0_i32_1 = arith.constant 0 : i32
    return %c0_i32, %c0_i32_0 : i32, i32
  }
  func.func @transform_2(%arg0: i32) -> (i32, i32) {
    %c0_i32 = arith.constant 0 : i32
    %c0_i32_0 = arith.constant 0 : i32
    %c0_i32_1 = arith.constant 0 : i32
    return %c0_i32, %c0_i32_0 : i32, i32
  }
  func.func @transform_3(%arg0: i32) -> (i32, i32) {
    %c0_i32 = arith.constant 0 : i32
    %c0_i32_0 = arith.constant 0 : i32
    %c0_i32_1 = arith.constant 0 : i32
    return %c0_i32, %c0_i32_0 : i32, i32
  }
  func.func @transform_4(%arg0: i32) -> (i32, i32) {
    %c0_i32 = arith.constant 0 : i32
    %c0_i32_0 = arith.constant 0 : i32
    %c0_i32_1 = arith.constant 0 : i32
    return %c0_i32, %c0_i32_0 : i32, i32
  }
  func.func @transform_5(%arg0: i32) -> (i32, i32) {
    %c0_i32 = arith.constant 0 : i32
    %c0_i32_0 = arith.constant 0 : i32
    %c0_i32_1 = arith.constant 0 : i32
    return %c0_i32, %c0_i32_0 : i32, i32
  }
  func.func @transform_6(%arg0: i32) -> (i32, i32) {
    %c0_i32 = arith.constant 0 : i32
    %c0_i32_0 = arith.constant 0 : i32
    %c0_i32_1 = arith.constant 0 : i32
    return %c0_i32, %c0_i32_0 : i32, i32
  }
  func.func @transform_7(%arg0: i32) -> (i32, i32) {
    %c0_i32 = arith.constant 0 : i32
    %c0_i32_0 = arith.constant 0 : i32
    return %c0_i32, %arg0 : i32, i32
  }
}

</mosaic_0001>

<llo_original>
// kernel: tpu_custom_call.1
$region0: #{tpu_custom_call.1}
  #allocation0 [shape = 'u32[]', space=smem, size = 0x4, offset = 0x4, fixed_abs, tag = 'smem constant byte address 0x4 - core index']
  #allocation1 [shape = 'u32[144,128]{1,0:T(1,128)}', space=vmem, size = 0x12000, scoped, tag = 'internal scratch']
  #allocation2 [shape = 'f32[1,1]{1,0:T(1,128)S(6)}', space=smem, size = 0x200, scoped, tag = 'scoped memory for tpu_custom_call.1']
  %s0 = inlined_call_operand.vmem [shape: f32[8,32], index: 0, kind: input, shape index: {}]
  %s1 = inlined_call_operand.vmem [shape: bf16[32,128], index: 1, kind: input, shape index: {}]
  %s2 = inlined_call_operand.vmem [shape: f32[1,128], index: 2, kind: input, shape index: {}]
  %s3 = inlined_call_operand.vmem [shape: bf16[128,64], index: 3, kind: input, shape index: {}]
  %s4 = inlined_call_operand.vmem [shape: f32[1,64], index: 4, kind: input, shape index: {}]
  %s5 = inlined_call_operand.vmem [shape: bf16[1,64], index: 5, kind: input, shape index: {}]
  %s6 = inlined_call_operand.<no memory space> [shape: f32[1,1], index: 6, kind: input, shape index: {}]
  %s7 = inlined_call_operand.hbm [shape: f32[1,8], index: 7, kind: output, shape index: {}]
  %s8 = sld [smem:[#allocation0]]
  $region38: #{tpu_custom_call.1} parent=0
    _
  %s10 = ssub.s32 1, %s8
  %s11 = scalar_select 0, %s10, %s8
  %12 = sst [smem:[#allocation2]] %s6
  $region1: #{tpu_custom_call.1} parent=0
    #allocation3 [shape = 'u8[512]{0}', space=vmem, size = 0x400, scoped, tag = 'output window, operand 0, single buffered']
    #allocation4 [shape = 's32[1]{0}', space=sflag, size = 0x4, scoped, tag = 'scoped memory for tpu_custom_call.1']
    %13 = vsyncpa [#allocation4], 0
    // Predicated region
    $region2: #{tpu_custom_call.1} parent=1 // pred_check
      _
    $region3: #{tpu_custom_call.1} parent=1 // pred_check_branch
      %15 = sbr.rel (0) target = $region5
    $region4: #{tpu_custom_call.1} parent=1 // pred_region
      _
    $region5: #{tpu_custom_call.1} parent=1 // pred_fallthru
      _
    // Predicated region
    $region6: #{tpu_custom_call.1} parent=1 // pred_check
      _
    $region7: #{tpu_custom_call.1} parent=1 // pred_check_branch
      %17 = sbr.rel (0) target = $region9
    $region8: #{tpu_custom_call.1} parent=1 // pred_region
      _
    $region9: #{tpu_custom_call.1} parent=1 // pred_fallthru
      _
    // Predicated region
    $region10: #{tpu_custom_call.1} parent=1 // pred_check
      _
    $region11: #{tpu_custom_call.1} parent=1 // pred_check_branch
      %19 = sbr.rel (0) target = $region13
    $region12: #{tpu_custom_call.1} parent=1 // pred_region
      _
    $region13: #{tpu_custom_call.1} parent=1 // pred_fallthru
      _
    // Predicated region
    $region14: #{tpu_custom_call.1} parent=1 // pred_check
      _
    $region15: #{tpu_custom_call.1} parent=1 // pred_check_branch
      %21 = sbr.rel (0) target = $region17
    $region16: #{tpu_custom_call.1} parent=1 // pred_region
      _
    $region17: #{tpu_custom_call.1} parent=1 // pred_fallthru
      _
    // Predicated region
    $region18: #{tpu_custom_call.1} parent=1 // pred_check
      _
    $region19: #{tpu_custom_call.1} parent=1 // pred_check_branch
      %23 = sbr.rel (0) target = $region21
    $region20: #{tpu_custom_call.1} parent=1 // pred_region
      _
    $region21: #{tpu_custom_call.1} parent=1 // pred_fallthru
      _
    // Predicated region
    $region22: #{tpu_custom_call.1} parent=1 // pred_check
      _
    $region23: #{tpu_custom_call.1} parent=1 // pred_check_branch
      %25 = sbr.rel (0) target = $region25
    $region24: #{tpu_custom_call.1} parent=1 // pred_region
      _
    $region25: #{tpu_custom_call.1} parent=1 // pred_fallthru
      _
    // Predicated region
    $region26: #{tpu_custom_call.1} parent=1 // pred_check
      _
    $region27: #{tpu_custom_call.1} parent=1 // pred_check_branch
      %27 = sbr.rel (0) target = $region29
    $region28: #{tpu_custom_call.1} parent=1 // pred_region
      _
    $region29: #{tpu_custom_call.1} parent=1 // pred_fallthru
      _
    %v29 = vld [vmem:[%s0] sm:$0xff]
    %v30 = vpack.c.bf16 %v29, %v29
    %v31 = vld [vmem:[%s1] sm:$0xf]
    %v32 = vld [vmem:[%s1 + $0x4] sm:$0xf]
    %v33 = vld [vmem:[%s1 + $0x8] sm:$0xf]
    %v34 = vld [vmem:[%s1 + $0xc] sm:$0xf]
    %v35 = vld [vmem:[%s2] sm:$0x1]
    %v37 = vlaneseq
    %v38 = vshrl.u32 %v37, 7
    %v39 = vsub.s32 0, %v38
    %v40 = vrot.slane %v35, %v39
    %v46 = vunpack.c.l.b16 %v31
    %v47 = vunpack.c.l.b16 %v32
    %v48 = vunpack.c.l.b16 %v33
    %v49 = vunpack.c.l.b16 %v34
    %v50 = vpack.c.b16 %v47, %v46
    %v51 = vpack.c.b16 %v49, %v48
    %vm54 = vcmask 261120
    %v56 = vsel %vm54, %v30, 0
    %58 = vmatprep.subr.bf16.mxu0 0
    %59 = vmatpush1.bf16.msra.mxu0 0
    %60 = vmatprep.subr.bf16.mxu0 0
    %61 = vmatpush1.bf16.msra.mxu0 0
    %62 = vmatprep.subr.bf16.mxu0 0
    %63 = vmatpush1.bf16.msra.mxu0 0
    %64 = vmatprep.subr.bf16.mxu0 0
    %65 = vmatpush1.bf16.msra.mxu0 0
    %66 = vmatprep.subr.bf16.mxu0 0
    %67 = vmatpush1.bf16.msra.mxu0 0
    %68 = vmatprep.subr.bf16.mxu0 0
    %69 = vmatpush1.bf16.msra.mxu0 0
    %70 = vmatprep.subr.bf16.mxu0 0
    %71 = vmatpush1.bf16.msra.mxu0 %v51
    %72 = vmatprep.subr.bf16.mxu0 0
    %73 = vmatpush1.bf16.msra.mxu0 %v50
    %74 = vmatprep.subr.bf16.mxu0 0
    %75 = vmatpush2.bf16.msra.mxu0 0
    %76 = vmatprep.subr.bf16.mxu0 0
    %77 = vmatpush2.bf16.msra.mxu0 0
    %78 = vmatprep.subr.bf16.mxu0 0
    %79 = vmatpush2.bf16.msra.mxu0 0
    %80 = vmatprep.subr.bf16.mxu0 0
    %81 = vmatpush2.bf16.msra.mxu0 0
    %82 = vmatprep.subr.bf16.mxu0 0
    %83 = vmatpush2.bf16.msra.mxu0 0
    %84 = vmatprep.subr.bf16.mxu0 0
    %85 = vmatpush2.bf16.msra.mxu0 0
    %86 = vmatprep.subr.bf16.mxu0 0
    %87 = vmatpush2.bf16.msra.mxu0 0
    %88 = vmatprep.subr.bf16.mxu0 0
    %89 = vmatpush2.bf16.msra.mxu0 0
    %90 = vmatprep.mubr.bf16.mxu0 0
    %91 = vmatmul.mubr.bf16.gmra.mxu0 %v56
    %v92 = vpop.f32.mrf.mxu0
    %v93 = vadd.f32 %v40, %v92
    %v94 = vpop.f32.mrf.mxu0
    %v95 = vpop.f32.mrf.mxu0
    %v96 = vpop.f32.mrf.mxu0
    %97 = vdwg.mxu0
    %v98 = vmax.f32 %v93, 0.0
    %v99 = vpack.c.bf16 %v98, %v98
    %v100 = vld [vmem:[%s3] sm:$0xf]
    %v101 = vld [vmem:[%s3 + $0x4] sm:$0xf]
    %v102 = vld [vmem:[%s3 + $0x8] sm:$0xf]
    %v103 = vld [vmem:[%s3 + $0xc] sm:$0xf]
    %v104 = vld [vmem:[%s3 + $0x10] sm:$0xf]
    %v105 = vld [vmem:[%s3 + $0x14] sm:$0xf]
    %v106 = vld [vmem:[%s3 + $0x18] sm:$0xf]
    %v107 = vld [vmem:[%s3 + $0x1c] sm:$0xf]
    %v108 = vld [vmem:[%s3 + $0x20] sm:$0xf]
    %v109 = vld [vmem:[%s3 + $0x24] sm:$0xf]
    %v110 = vld [vmem:[%s3 + $0x28] sm:$0xf]
    %v111 = vld [vmem:[%s3 + $0x2c] sm:$0xf]
    %v112 = vld [vmem:[%s3 + $0x30] sm:$0xf]
    %v113 = vld [vmem:[%s3 + $0x34] sm:$0xf]
    %v114 = vld [vmem:[%s3 + $0x38] sm:$0xf]
    %v115 = vld [vmem:[%s3 + $0x3c] sm:$0xf]
    %v116 = vld [vmem:[%s4] sm:$0x1]
    %v118 = vlaneseq
    %v119 = vshrl.u32 %v118, 7
    %v120 = vsub.s32 0, %v119
    %v121 = vrot.slane %v116, %v120
    %v139 = vunpack.c.l.b16 %v100
    %v140 = vunpack.c.l.b16 %v101
    %v141 = vunpack.c.l.b16 %v102
    %v142 = vunpack.c.l.b16 %v103
    %v143 = vunpack.c.l.b16 %v104
    %v144 = vunpack.c.l.b16 %v105
    %v145 = vunpack.c.l.b16 %v106
    %v146 = vunpack.c.l.b16 %v107
    %v147 = vunpack.c.l.b16 %v108
    %v148 = vunpack.c.l.b16 %v109
    %v149 = vunpack.c.l.b16 %v110
    %v150 = vunpack.c.l.b16 %v111
    %v151 = vunpack.c.l.b16 %v112
    %v152 = vunpack.c.l.b16 %v113
    %v153 = vunpack.c.l.b16 %v114
    %v154 = vunpack.c.l.b16 %v115
    %v155 = vpack.c.b16 %v140, %v139
    %v156 = vpack.c.b16 %v142, %v141
    %v157 = vpack.c.b16 %v144, %v143
    %v158 = vpack.c.b16 %v146, %v145
    %v159 = vpack.c.b16 %v148, %v147
    %v160 = vpack.c.b16 %v150, %v149
    %v161 = vpack.c.b16 %v152, %v151
    %v162 = vpack.c.b16 %v154, %v153
    %171 = vmatprep.subr.bf16.mxu0 0
    %172 = vmatpush1.bf16.msra.mxu0 %v162
    %173 = vmatprep.subr.bf16.mxu0 0
    %174 = vmatpush1.bf16.msra.mxu0 %v161
    %175 = vmatprep.subr.bf16.mxu0 0
    %176 = vmatpush1.bf16.msra.mxu0 %v160
    %177 = vmatprep.subr.bf16.mxu0 0
    %178 = vmatpush1.bf16.msra.mxu0 %v159
    %179 = vmatprep.subr.bf16.mxu0 0
    %180 = vmatpush1.bf16.msra.mxu0 %v158
    %181 = vmatprep.subr.bf16.mxu0 0
    %182 = vmatpush1.bf16.msra.mxu0 %v157
    %183 = vmatprep.subr.bf16.mxu0 0
    %184 = vmatpush1.bf16.msra.mxu0 %v156
    %185 = vmatprep.subr.bf16.mxu0 0
    %186 = vmatpush1.bf16.msra.mxu0 %v155
    %187 = vmatprep.subr.bf16.mxu0 0
    %188 = vmatpush2.bf16.msra.mxu0 0
    %189 = vmatprep.subr.bf16.mxu0 0
    %190 = vmatpush2.bf16.msra.mxu0 0
    %191 = vmatprep.subr.bf16.mxu0 0
    %192 = vmatpush2.bf16.msra.mxu0 0
    %193 = vmatprep.subr.bf16.mxu0 0
    %194 = vmatpush2.bf16.msra.mxu0 0
    %195 = vmatprep.subr.bf16.mxu0 0
    %196 = vmatpush2.bf16.msra.mxu0 0
    %197 = vmatprep.subr.bf16.mxu0 0
    %198 = vmatpush2.bf16.msra.mxu0 0
    %199 = vmatprep.subr.bf16.mxu0 0
    %200 = vmatpush2.bf16.msra.mxu0 0
    %201 = vmatprep.subr.bf16.mxu0 0
    %202 = vmatpush2.bf16.msra.mxu0 0
    %203 = vmatprep.mubr.bf16.mxu0 0
    %204 = vmatmul.mubr.bf16.gmra.mxu0 %v99
    %v205 = vpop.f32.mrf.mxu0
    %v206 = vadd.f32 %v121, %v205
    %v207 = vpop.f32.mrf.mxu0
    %v208 = vpop.f32.mrf.mxu0
    %v209 = vpop.f32.mrf.mxu0
    %210 = vdwg.mxu0
    %v211 = vmax.f32 %v206, 0.0
    %v212 = vld [vmem:[%s5] sm:$0x1]
    %v213 = vpack.c.bf16 %v211, %v211
    %s214 = sld [smem:[#allocation2]]
    %v215 = vstv %s214
    %vm216 = vcmask 523264
    %v218 = vsel %vm216, %v212, 0
    %v221 = vsel %vm216, %v213, 0
    %223 = vmatprep.subr.bf16.mxu0 0
    %224 = vmatpush1.bf16.xpose.msra.mxu0 0
    %225 = vmatprep.subr.bf16.mxu0 0
    %226 = vmatpush1.bf16.xpose.msra.mxu0 0
    %227 = vmatprep.subr.bf16.mxu0 0
    %228 = vmatpush1.bf16.xpose.msra.mxu0 0
    %229 = vmatprep.subr.bf16.mxu0 0
    %230 = vmatpush1.bf16.xpose.msra.mxu0 0
    %231 = vmatprep.subr.bf16.mxu0 0
    %232 = vmatpush1.bf16.xpose.msra.mxu0 0
    %233 = vmatprep.subr.bf16.mxu0 0
    %234 = vmatpush1.bf16.xpose.msra.mxu0 0
    %235 = vmatprep.subr.bf16.mxu0 0
    %236 = vmatpush1.bf16.xpose.msra.mxu0 0
    %237 = vmatprep.subr.bf16.mxu0 0
    %238 = vmatpush1.bf16.xpose.msra.mxu0 %v221
    %239 = vmatprep.subr.bf16.mxu0 0
    %240 = vmatpush2.bf16.xpose.msra.mxu0 0
    %241 = vmatprep.subr.bf16.mxu0 0
    %242 = vmatpush2.bf16.xpose.msra.mxu0 0
    %243 = vmatprep.subr.bf16.mxu0 0
    %244 = vmatpush2.bf16.xpose.msra.mxu0 0
    %245 = vmatprep.subr.bf16.mxu0 0
    %246 = vmatpush2.bf16.xpose.msra.mxu0 0
    %247 = vmatprep.subr.bf16.mxu0 0
    %248 = vmatpush2.bf16.xpose.msra.mxu0 0
    %249 = vmatprep.subr.bf16.mxu0 0
    %250 = vmatpush2.bf16.xpose.msra.mxu0 0
    %251 = vmatprep.subr.bf16.mxu0 0
    %252 = vmatpush2.bf16.xpose.msra.mxu0 0
    %253 = vmatprep.subr.bf16.mxu0 0
    %254 = vmatpush2.bf16.xpose.msra.mxu0 0
    %255 = vmatprep.mubr.bf16.mxu0 0
    %256 = vmatmul.mubr.bf16.gmra.mxu0 %v218
    %v257 = vpop.f32.mrf.mxu0
    %v258 = vadd.f32 %v215, %v257
    %v259 = vpop.f32.mrf.mxu0
    %v260 = vpop.f32.mrf.mxu0
    %v261 = vpop.f32.mrf.mxu0
    %262 = vdwg.mxu0
    %v263 = vxor.u32 %v258, 2147483648
    %v264 = vmul.f32 %v263, 1.442695
    %v265 = vpow.pop %v264
    %v266 = vadd.f32 %v265, 1.0
    %v267 = vrcp.pop %v266
    %v268 = vmul.f32 1.0, %v267
    %vm269 = vcmask 57344
    %270 = vst.msk [vmem:[#allocation3] sm:$0x1] %vm269, %v268
    // Predicated region
    $region30: #{tpu_custom_call.1} parent=1 // pred_check
      _
    $region31: #{tpu_custom_call.1} parent=1 // pred_check_branch
      %272 = sbr.rel (0) target = $region33
    $region32: #{tpu_custom_call.1} parent=1 // pred_region
      %s274 = ssub.s32 16, 16
      %275 = vsyncadd [#allocation4], %s274
      %s277 = sshll.u32 [#allocation3], 4
      %s278 = int_to_ptr.vmem [resolvable:$true] %s277
      %280 = dma.vmem_to_hbm [thread:$0]  %s278, 16, %s7, [#allocation4]
    $region33: #{tpu_custom_call.1} parent=1 // pred_fallthru
      _
    // Predicated region
    $region34: #{tpu_custom_call.1} parent=1 // pred_check
      _
    $region35: #{tpu_custom_call.1} parent=1 // pred_check_branch
      %282 = sbr.rel (0) target = $region37
    $region36: #{tpu_custom_call.1} parent=1 // pred_region
      %283 = dma.done [#allocation4], 16
    $region37: #{tpu_custom_call.1} parent=1 // pred_fallthru
      _
    %284 = vsyncpa [#allocation4], 1

</llo_original>
